<compile_context>
chip_gen: v7x
topology: tpu7x:2x2x1
jax: 0.10.0
libtpu: 0.0.40
codegen_flags: <defaults>
</compile_context>

<pallas_src>
import jax
import jax.numpy as jnp
from jax.experimental import pallas as pl
from jax.experimental.pallas import tpu as pltpu


def motion_kernel(x_ref, w_ref, b_ref, out_ref, acc_ref):
    """Fused RGBDiff + linear head, one temporal diff frame per grid step.

    x_ref:   (T, tn, F)   clip tile, temporal axis leading (dynamic-indexable)
    w_ref:   (F, Kp)      bf16 weight slab for diff frame t = program_id(1)
    b_ref:   (1, Kp)      f32 bias
    out_ref: (tn, Kp)     f32 logits tile (written once, on the last t step)
    acc_ref: (tn, Kp)     f32 VMEM accumulator scratch
    """
    t = pl.program_id(1)

    @pl.when(t == 0)
    def _():
        acc_ref[...] = jnp.zeros_like(acc_ref)

    # RGBDiff for frame t: clip[:, t+1] - clip[:, t]. Subtract in f32 (VPU),
    # cast only the MXU operand to bf16.
    diff = (x_ref[t + 1] - x_ref[t]).astype(jnp.bfloat16)          # (tn, F)
    acc_ref[...] += jnp.dot(diff, w_ref[...],
                            preferred_element_type=jnp.float32)    # (tn, Kp)

    @pl.when(t == pl.num_programs(1) - 1)
    def _():
        out_ref[...] = (acc_ref[...] + b_ref[...]).astype(out_ref.dtype)


def motion_network(clip, w, b, mode="rgbdiff"):
    """clip: (N, T, C, H, W) f32; w: (T-1, C*H*W, K); b: (1, K) -> (N, K) f32."""
    if mode != "rgbdiff":
        # TODO(synk): 'flow' (identity transform) and 'rgbrgbdiff' modes not
        # wired into the kernel; they only change the head's input width.
        raise NotImplementedError(mode)

    N, T, C, H, W = clip.shape
    F = C * H * W
    K = w.shape[-1]
    assert w.shape == (T - 1, F, K)

    # Batch tile: MXU-sized rows for real batches, sublane-minimum for toys.
    tn = 128 if N >= 128 else 8
    Np = ((N + tn - 1) // tn) * tn          # pad batch to a tile multiple
    Kp = ((K + 127) // 128) * 128           # lane-dense output

    # Layout: (T, Np, F) — temporal axis leading (cheap dynamic index), F on lanes.
    x = clip.reshape(N, T, F).transpose(1, 0, 2)
    x = jnp.pad(x, ((0, 0), (0, Np - N), (0, 0)))

    w_p = jnp.pad(w, ((0, 0), (0, 0), (0, Kp - K))).astype(jnp.bfloat16)
    b_p = jnp.pad(b.reshape(1, K).astype(jnp.float32), ((0, 0), (0, Kp - K)))

    grid = (Np // tn, T - 1)                # reduction (temporal) axis last

    out = pl.pallas_call(
        motion_kernel,
        out_shape=jax.ShapeDtypeStruct((Np, Kp), jnp.float32),
        grid_spec=pltpu.PrefetchScalarGridSpec(
            num_scalar_prefetch=0,
            grid=grid,
            in_specs=[
                # Clip tile: resident across the temporal loop (same block per t).
                pl.BlockSpec((T, tn, F), lambda n, t: (0, n, 0)),
                # One (F, Kp) weight slab per diff frame -> pipelined weight DMA.
                pl.BlockSpec((None, F, Kp), lambda n, t: (t, 0, 0)),
                pl.BlockSpec((1, Kp), lambda n, t: (0, 0)),
            ],
            out_specs=pl.BlockSpec((tn, Kp), lambda n, t: (n, 0)),
            scratch_shapes=[pltpu.VMEM((tn, Kp), jnp.float32)],
        ),
        compiler_params=pltpu.CompilerParams(
            dimension_semantics=("parallel", "arbitrary"),
            vmem_limit_bytes=96 * 1024 * 1024,
        ),
    )(x, w_p, b_p)

    return out[:N, :K]


if __name__ == "__main__":
    # Small shapes consistent with the (N, T, C, H, W) forward contract.
    N, T, C, H, W = 2, 8, 4, 16, 16
    K = 32                      # synthetic head: number of classes
    F = C * H * W

    key = jax.random.PRNGKey(0)
    k_clip, k_w, k_b = jax.random.split(key, 3)
    clip = jax.random.normal(k_clip, (N, T, C, H, W), dtype=jnp.float32)
    # Deterministic synthetic parameters for the injected `model`.
    w = jax.random.normal(k_w, (T - 1, F, K), dtype=jnp.float32) * 0.02
    b = jax.random.normal(k_b, (1, K), dtype=jnp.float32) * 0.02

    out = jax.block_until_ready(motion_network(clip, w, b))

    # Pure-JAX f32 reference of the same semantics (RGBDiff + linear head).
    x = clip.reshape(N, T, F)
    diff = x[:, 1:, :] - x[:, :-1, :]                       # (N, T-1, F)
    ref = jnp.einsum("ntf,tfk->nk", diff, w) + b            # (N, K)

    assert out.shape == (N, K)
    # Kernel matmul runs in bf16 (f32 accumulation) -> relaxed tolerance.
    assert jnp.allclose(out, ref, atol=5e-2, rtol=2e-2), (
        float(jnp.max(jnp.abs(out - ref))))

    print("KERNEL_OK")
</pallas_src>

<mosaic_0001>
module attributes {stable_mosaic.version = 11 : i64} {
  func.func @motion_kernel(%arg0: i32, %arg1: i32, %arg2: memref<8x8x1024xf32, #tpu.memory_space<vmem>>, %arg3: memref<1x1024x128xbf16, #tpu.memory_space<vmem>>, %arg4: memref<1x128xf32, #tpu.memory_space<vmem>>, %arg5: memref<8x128xf32, #tpu.memory_space<vmem>>, %arg6: memref<8x128xf32, #tpu.memory_space<vmem>>) attributes {dimension_semantics = [#tpu.dimension_semantics<parallel>, #tpu.dimension_semantics<arbitrary>], iteration_bounds = array<i64: 1, 7>, scalar_prefetch = 0 : i64, scratch_operands = 1 : i64, tpu.core_type = #tpu.core_type<tc>, window_params = [{transform_indices = @transform_0, window_bounds = array<i64: 8, 8, 1024>}, {transform_indices = @transform_1, window_bounds = array<i64: 1, 1024, 128>}, {pipeline_mode = #tpu.pipeline_mode<synchronous>, transform_indices = @transform_2, window_bounds = array<i64: 1, 128>}, {transform_indices = @transform_3, window_bounds = array<i64: 8, 128>}]} {
    %c0_i32 = arith.constant 0 : i32
    %0 = arith.cmpi eq, %arg1, %c0_i32 : i32
    %1 = arith.extui %0 : i1 to i32
    %c0_i32_0 = arith.constant 0 : i32
    %2 = arith.cmpi ne, %1, %c0_i32_0 : i32
    scf.if %2 {
      %cst_12 = arith.constant 0.000000e+00 : f32
      %21 = vector.broadcast %cst_12 : f32 to vector<8x128xf32>
      %c0_13 = arith.constant 0 : index
      %c0_14 = arith.constant 0 : index
      %22 = vector.load %arg6[%c0_13, %c0_14] : memref<8x128xf32, #tpu.memory_space<vmem>>, vector<8x128xf32>
      tpu.vector_store %arg6[%c0_13, %c0_14], %21 {strides = array<i32>} : memref<8x128xf32, #tpu.memory_space<vmem>>, vector<8x128xf32>,
    } else {
    }
    %c1_i32 = arith.constant 1 : i32
    %3 = arith.addi %arg1, %c1_i32 : i32
    %4 = arith.index_cast %3 : i32 to index
    %c0 = arith.constant 0 : index
    %c0_1 = arith.constant 0 : index
    %5 = vector.load %arg2[%4, %c0, %c0_1] : memref<8x8x1024xf32, #tpu.memory_space<vmem>>, vector<1x8x1024xf32>
    %6 = vector.shape_cast %5 : vector<1x8x1024xf32> to vector<8x1024xf32>
    %7 = arith.index_cast %arg1 : i32 to index
    %c0_2 = arith.constant 0 : index
    %c0_3 = arith.constant 0 : index
    %8 = vector.load %arg2[%7, %c0_2, %c0_3] : memref<8x8x1024xf32, #tpu.memory_space<vmem>>, vector<1x8x1024xf32>
    %9 = vector.shape_cast %8 : vector<1x8x1024xf32> to vector<8x1024xf32>
    %10 = arith.subf %6, %9 : vector<8x1024xf32>
    %11 = arith.truncf %10 : vector<8x1024xf32> to vector<8x1024xbf16>
    %c0_4 = arith.constant 0 : index
    %c0_5 = arith.constant 0 : index
    %12 = vector.load %arg6[%c0_4, %c0_5] : memref<8x128xf32, #tpu.memory_space<vmem>>, vector<8x128xf32>
    %c0_6 = arith.constant 0 : index
    %c0_7 = arith.constant 0 : index
    %c0_8 = arith.constant 0 : index
    %13 = vector.load %arg3[%c0_6, %c0_7, %c0_8] : memref<1x1024x128xbf16, #tpu.memory_space<vmem>>, vector<1x1024x128xbf16>
    %14 = vector.shape_cast %13 : vector<1x1024x128xbf16> to vector<1024x128xbf16>
    %cst = arith.constant dense<0.000000e+00> : vector<8x128xf32>
    %15 = tpu.matmul %11, %14, %cst {dimension_numbers = #tpu.dot_dimension_numbers<[1], [0], [0], [1], [0, 0, 1, 1], [], []>} : vector<8x1024xbf16>, vector<1024x128xbf16>, vector<8x128xf32> -> vector<8x128xf32>
    %16 = arith.addf %12, %15 : vector<8x128xf32>
    %c0_9 = arith.constant 0 : index
    %c0_10 = arith.constant 0 : index
    %17 = vector.load %arg6[%c0_9, %c0_10] : memref<8x128xf32, #tpu.memory_space<vmem>>, vector<8x128xf32>
    tpu.vector_store %arg6[%c0_9, %c0_10], %16 {strides = array<i32>} : memref<8x128xf32, #tpu.memory_space<vmem>>, vector<8x128xf32>,
    %c6_i32 = arith.constant 6 : i32
    %18 = arith.cmpi eq, %arg1, %c6_i32 : i32
    %19 = arith.extui %18 : i1 to i32
    %c0_i32_11 = arith.constant 0 : i32
    %20 = arith.cmpi ne, %19, %c0_i32_11 : i32
    scf.if %20 {
      %c0_12 = arith.constant 0 : index
      %c0_13 = arith.constant 0 : index
      %21 = vector.load %arg6[%c0_12, %c0_13] : memref<8x128xf32, #tpu.memory_space<vmem>>, vector<8x128xf32>
      %c0_14 = arith.constant 0 : index
      %c0_15 = arith.constant 0 : index
      %22 = vector.load %arg4[%c0_14, %c0_15] : memref<1x128xf32, #tpu.memory_space<vmem>>, vector<1x128xf32>
      %23 = vector.broadcast %22 : vector<1x128xf32> to vector<8x128xf32>
      %24 = arith.addf %21, %23 : vector<8x128xf32>
      %c0_16 = arith.constant 0 : index
      %c0_17 = arith.constant 0 : index
      %25 = vector.load %arg5[%c0_16, %c0_17] : memref<8x128xf32, #tpu.memory_space<vmem>>, vector<8x128xf32>
      tpu.vector_store %arg5[%c0_16, %c0_17], %24 {strides = array<i32>} : memref<8x128xf32, #tpu.memory_space<vmem>>, vector<8x128xf32>,
    } else {
    }
    return
  }
  func.func @transform_0(%arg0: i32, %arg1: i32) -> (i32, i32, i32) {
    %c0_i32 = arith.constant 0 : i32
    %c0_i32_0 = arith.constant 0 : i32
    %c0_i32_1 = arith.constant 0 : i32
    return %c0_i32, %arg0, %c0_i32_0 : i32, i32, i32
  }
  func.func @transform_1(%arg0: i32, %arg1: i32) -> (i32, i32, i32) {
    %c0_i32 = arith.constant 0 : i32
    %c0_i32_0 = arith.constant 0 : i32
    %c0_i32_1 = arith.constant 0 : i32
    return %arg1, %c0_i32, %c0_i32_0 : i32, i32, i32
  }
  func.func @transform_2(%arg0: i32, %arg1: i32) -> (i32, i32) {
    %c0_i32 = arith.constant 0 : i32
    %c0_i32_0 = arith.constant 0 : i32
    %c0_i32_1 = arith.constant 0 : i32
    return %c0_i32, %c0_i32_0 : i32, i32
  }
  func.func @transform_3(%arg0: i32, %arg1: i32) -> (i32, i32) {
    %c0_i32 = arith.constant 0 : i32
    %c0_i32_0 = arith.constant 0 : i32
    return %arg0, %c0_i32 : i32, i32
  }
}

</mosaic_0001>

<llo_original>
// kernel: tpu_custom_call.1
$region0: #{tpu_custom_call.1}
  #allocation0 [shape = 'u32[]', space=smem, size = 0x4, offset = 0x4, fixed_abs, tag = 'smem constant byte address 0x4 - core index']
  #allocation1 [shape = 'u32[144,128]{1,0:T(1,128)}', space=vmem, size = 0x12000, scoped, tag = 'internal scratch']
  #allocation2 [shape = 'f32[8,128]{1,0:T(8,128)}', space=vmem, size = 0x1000, scoped, tag = 'scratch operand']
  %s0 = inlined_call_operand.hbm [shape: f32[8,8,1024], index: 0, kind: input, shape index: {}]
  %s1 = inlined_call_operand.hbm [shape: bf16[7,1024,128], index: 1, kind: input, shape index: {}]
  %s2 = inlined_call_operand.hbm [shape: f32[1,128], index: 2, kind: input, shape index: {}]
  %s3 = inlined_call_operand.hbm [shape: f32[8,128], index: 3, kind: output, shape index: {}]
  %s4 = sld [smem:[#allocation0]]
  $region65: #{tpu_custom_call.1} parent=0
    _
  %s6 = ssub.s32 1, %s4
  %s7 = scalar_select 0, %s6, %s4
  $region1: #{tpu_custom_call.1} parent=0
    #allocation3 [shape = 'u8[262144]{0}', space=vmem, size = 0x40000, scoped, tag = 'input window, operand 0, single buffered']
    #allocation4 [shape = 's32[2]{0}', space=sflag, size = 0x8, scoped, tag = 'scoped memory for tpu_custom_call.1']
    #allocation5 [shape = 's32[2]{0}', space=sflag, size = 0x8, scoped, tag = 'scoped memory for tpu_custom_call.1']
    #allocation6 [shape = 'u8[524288]{0}', space=vmem, size = 0x80000, scoped, tag = 'input window, operand 1']
    #allocation7 [shape = 's32[2]{0}', space=sflag, size = 0x8, scoped, tag = 'scoped memory for tpu_custom_call.1']
    #allocation8 [shape = 'u8[512]{0}', space=vmem, size = 0x400, scoped, tag = 'input window, operand 2, single buffered']
    #allocation9 [shape = 'u8[4096]{0}', space=vmem, size = 0x1000, scoped, tag = 'output window, operand 0, single buffered']
    %8 = vsyncpa [#allocation4], 0
    %9 = vsyncpa [#allocation7], 0
    %s10 = scalar_lea.sflag [#allocation7], 1
    %11 = vsyncpa %s10, 0
    %12 = vsyncpa [#allocation5], 0
    loop: start=0, step=1, limit=9
    $region2: #{tpu_custom_call.1} parent=1 // loop_pre_header
      _
    $region3: #{tpu_custom_call.1} parent=1 // loop_header
      %s14 = sphi 0, %s18
      %p15 = scmp.ge.s32.totalorder %s14, 9
      %s21 = sphi 0, %s33
      %s22 = sphi 0, %s29
      %s23 = sphi 0, %s21
      %s24 = sphi 0, %s22
      %s25 = sphi 0, %s23
      %s26 = sphi 0, %s24
      %s36 = sphi 0, %s38
      %s39 = sphi 0, %s36
      %s40 = sphi 0, %s39
      %s56 = sphi 0, %s40
      %s62 = sphi 0, %s64
      %s65 = sphi 0, %s62
      %s66 = sphi 0, %s65
      %s82 = sphi 0, %s66
      %s86 = sphi 0, %s86
      %s88 = sphi 0, %s86
      %s89 = sphi 0, %s88
      %s103 = sphi 0, %s89
      %s109 = sphi 0, %s111
      %s112 = sphi 0, %s109
      %s113 = sphi 0, %s112
      %s129 = sphi 0, %s113
    $region4: #{tpu_custom_call.1} parent=1 // loop_header_branch
      %17 = sbr.rel (%p15) target = $region8
    $region5: #{tpu_custom_call.1} parent=1 // loop_body
      %s19 = ssub.s32 %s14, 1
      %s20 = ssub.s32 %s14, 2
      %s27 = sadd.s32 1, %s22
      %p28 = scmp.ge.s32.totalorder %s27, 7
      %s29 = scalar_select %p28, 0, %s27
      %s30 = sadd.s32 1, %s21
      %s31 = scalar_select %p28, %s30, %s21
      %p32 = scmp.ge.s32.totalorder %s31, 1
      %s33 = scalar_select %p32, 0, %s31
      %s34 = ssub.s32 %s21, %s33
      %p35 = scmp.eq.s32.totalorder %s34, 0
      %s37 = sadd.s32 %s36, 1
      %s38 = scalar_select %p35, %s36, %s37
      %p41 = pneg %p35
      %p42 = scmp.eq.s32.totalorder %s14, 6
      %p43 = por %p41, %p42
      %p44 = scmp.ne.s32.totalorder %s36, %s39
      %p45 = scmp.eq.s32.totalorder %s14, 0
      %p46 = por %p44, %p45
      %p47 = scmp.ne.s32.totalorder %s36, %s39
      %p48 = scmp.eq.s32.totalorder %s19, 6
      %p49 = por %p47, %p48
      %p50 = scmp.ne.s32.totalorder %s39, %s40
      %p51 = scmp.eq.s32.totalorder %s19, 0
      %p52 = por %p50, %p51
      %p53 = scmp.ne.s32.totalorder %s39, %s40
      %p54 = scmp.eq.s32.totalorder %s20, 6
      %p55 = por %p53, %p54
      %p57 = scmp.ne.s32.totalorder %s40, %s56
      %p58 = scmp.eq.s32.totalorder %s20, 0
      %p59 = por %p57, %p58
      %s60 = ssub.s32 %s22, %s29
      %p61 = scmp.eq.s32.totalorder %s60, 0
      %s63 = sadd.s32 %s62, 1
      %s64 = scalar_select %p61, %s62, %s63
      %p67 = pneg %p61
      %p68 = scmp.eq.s32.totalorder %s14, 6
      %p69 = por %p67, %p68
      %p70 = scmp.ne.s32.totalorder %s62, %s65
      %p71 = scmp.eq.s32.totalorder %s14, 0
      %p72 = por %p70, %p71
      %p73 = scmp.ne.s32.totalorder %s62, %s65
      %p74 = scmp.eq.s32.totalorder %s19, 6
      %p75 = por %p73, %p74
      %p76 = scmp.ne.s32.totalorder %s65, %s66
      %p77 = scmp.eq.s32.totalorder %s19, 0
      %p78 = por %p76, %p77
      %p79 = scmp.ne.s32.totalorder %s65, %s66
      %p80 = scmp.eq.s32.totalorder %s20, 6
      %p81 = por %p79, %p80
      %p83 = scmp.ne.s32.totalorder %s66, %s82
      %p84 = scmp.eq.s32.totalorder %s20, 0
      %p85 = por %p83, %p84
      %s87 = sadd.s32 %s86, 1
      %p90 = scmp.eq.s32.totalorder %s14, 6
      %p91 = scmp.ne.s32.totalorder %s86, %s88
      %p92 = scmp.eq.s32.totalorder %s14, 0
      %p93 = por %p91, %p92
      %p94 = scmp.ne.s32.totalorder %s86, %s88
      %p95 = scmp.eq.s32.totalorder %s19, 6
      %p96 = por %p94, %p95
      %p97 = scmp.ne.s32.totalorder %s88, %s89
      %p98 = scmp.eq.s32.totalorder %s19, 0
      %p99 = por %p97, %p98
      %p100 = scmp.ne.s32.totalorder %s88, %s89
      %p101 = scmp.eq.s32.totalorder %s20, 6
      %p102 = por %p100, %p101
      %p104 = scmp.ne.s32.totalorder %s89, %s103
      %p105 = scmp.eq.s32.totalorder %s20, 0
      %p106 = por %p104, %p105
      %s107 = ssub.s32 %s21, %s33
      %p108 = scmp.eq.s32.totalorder %s107, 0
      %s110 = sadd.s32 %s109, 1
      %s111 = scalar_select %p108, %s109, %s110
      %p114 = pneg %p108
      %p115 = scmp.eq.s32.totalorder %s14, 6
      %p116 = por %p114, %p115
      %p117 = scmp.ne.s32.totalorder %s109, %s112
      %p118 = scmp.eq.s32.totalorder %s14, 0
      %p119 = por %p117, %p118
      %p120 = scmp.ne.s32.totalorder %s109, %s112
      %p121 = scmp.eq.s32.totalorder %s19, 6
      %p122 = por %p120, %p121
      %p123 = scmp.ne.s32.totalorder %s112, %s113
      %p124 = scmp.eq.s32.totalorder %s19, 0
      %p125 = por %p123, %p124
      %p126 = scmp.ne.s32.totalorder %s112, %s113
      %p127 = scmp.eq.s32.totalorder %s20, 6
      %p128 = por %p126, %p127
      %p130 = scmp.ne.s32.totalorder %s113, %s129
      %p131 = scmp.eq.s32.totalorder %s20, 0
      %p132 = por %p130, %p131
      %p133 = scmp.le.s32.totalorder 1, %s14
      %p134 = scmp.lt.s32.totalorder %s14, 8
      %p135 = pnand %p133, %p134
      %p136 = pneg %p135
      // Predicated region
      $region9: #{tpu_custom_call.1} parent=5 // pred_check
        _
      $region10: #{tpu_custom_call.1} parent=5 // pred_check_branch
        %138 = sbr.rel (%p135) target = $region12
      $region11: #{tpu_custom_call.1} parent=5 // pred_region
        %s139 = ssub.s32 %s14, 1
        // Predicated region
        $region13: #{tpu_custom_call.1} parent=11 // pred_check
          %p140 = pneg %p52
        $region14: #{tpu_custom_call.1} parent=11 // pred_check_branch
          %142 = sbr.rel (%p140) target = $region16
        $region15: #{tpu_custom_call.1} parent=11 // pred_region
          %s144 = ssub.s32 8192, 8192
          %145 = vsyncadd [#allocation4], %s144
          %s146 = smul.addr %s23, 8
          %s147 = smul.addr %s146, 128
          %s148 = scalar_lea.hbm %s0, %s147
          %s149 = sshll.u32 [#allocation3], 4
          %s150 = int_to_ptr.vmem [resolvable:$true] %s149
          %155 = dma.hbm_to_vmem [thread:$0]  %s148, 8192, %s150, [#allocation4], 1024, 1024, 64
        $region16: #{tpu_custom_call.1} parent=11 // pred_fallthru
          _
        // Predicated region
        $region17: #{tpu_custom_call.1} parent=11 // pred_check
          %p156 = pneg %p99
        $region18: #{tpu_custom_call.1} parent=11 // pred_check_branch
          %158 = sbr.rel (%p156) target = $region20
        $region19: #{tpu_custom_call.1} parent=11 // pred_region
          %s160 = ssub.s32 16, 16
          %161 = vsyncadd [#allocation7], %s160
          %s163 = sshll.u32 [#allocation8], 4
          %s164 = int_to_ptr.vmem [resolvable:$true] %s163
          %166 = dma.hbm_to_vmem [thread:$0]  %s2, 16, %s164, [#allocation7]
        $region20: #{tpu_custom_call.1} parent=11 // pred_fallthru
          _
      $region12: #{tpu_custom_call.1} parent=5 // pred_fallthru
        _
      %p167 = scmp.lt.s32.totalorder %s14, 7
      // Predicated region
      $region21: #{tpu_custom_call.1} parent=5 // pred_check
        %p168 = pneg %p167
      $region22: #{tpu_custom_call.1} parent=5 // pred_check_branch
        %170 = sbr.rel (%p168) target = $region24
      $region23: #{tpu_custom_call.1} parent=5 // pred_region
        // Predicated region
        $region25: #{tpu_custom_call.1} parent=23 // pred_check
          %p171 = pneg %p72
        $region26: #{tpu_custom_call.1} parent=23 // pred_check_branch
          %173 = sbr.rel (%p171) target = $region28
        $region27: #{tpu_custom_call.1} parent=23 // pred_region
          %s174 = sand.u32 %s14, 1
          %s175 = scalar_lea.sflag [#allocation7], %s174
          %s176 = sand.u32 %s62, 1
          %s177 = smul.addr %s176, 512
          %s178 = scalar_lea.vmem [#allocation6], %s177
          %s180 = ssub.s32 8192, 8192
          %181 = vsyncadd %s175, %s180
          %s182 = smul.addr %s22, 128
          %s183 = smul.addr %s182, 64
          %s184 = scalar_lea.hbm %s1, %s183
          %s185 = sshll.u32 %s178, 4
          %s186 = int_to_ptr.vmem [resolvable:$true] %s185
          %191 = dma.hbm_to_vmem [thread:$0]  %s184, 8192, %s186, %s175, 64, 64, 4
        $region28: #{tpu_custom_call.1} parent=23 // pred_fallthru
          _
      $region24: #{tpu_custom_call.1} parent=5 // pred_fallthru
        _
      %p192 = scmp.le.s32.totalorder 1, %s14
      %p193 = scmp.lt.s32.totalorder %s14, 8
      %p194 = pnand %p192, %p193
      %p195 = pneg %p194
      // Predicated region
      $region29: #{tpu_custom_call.1} parent=5 // pred_check
        _
      $region30: #{tpu_custom_call.1} parent=5 // pred_check_branch
        %197 = sbr.rel (%p194) target = $region32
      $region31: #{tpu_custom_call.1} parent=5 // pred_region
        %s198 = ssub.s32 %s14, 1
        // Predicated region
        $region33: #{tpu_custom_call.1} parent=31 // pred_check
          %p199 = pneg %p52
        $region34: #{tpu_custom_call.1} parent=31 // pred_check_branch
          %201 = sbr.rel (%p199) target = $region36
        $region35: #{tpu_custom_call.1} parent=31 // pred_region
          %202 = dma.done [#allocation4], 8192
        $region36: #{tpu_custom_call.1} parent=31 // pred_fallthru
          _
        %s203 = sand.u32 %s19, 1
        %s204 = scalar_lea.sflag [#allocation7], %s203
        %s205 = sand.u32 %s65, 1
        %s206 = smul.addr %s205, 512
        %s207 = scalar_lea.vmem [#allocation6], %s206
        // Predicated region
        $region37: #{tpu_custom_call.1} parent=31 // pred_check
          %p208 = pneg %p78
        $region38: #{tpu_custom_call.1} parent=31 // pred_check_branch
          %210 = sbr.rel (%p208) target = $region40
        $region39: #{tpu_custom_call.1} parent=31 // pred_region
          %211 = dma.done %s204, 8192
        $region40: #{tpu_custom_call.1} parent=31 // pred_fallthru
          _
        // Predicated region
        $region41: #{tpu_custom_call.1} parent=31 // pred_check
          %p212 = pneg %p99
        $region42: #{tpu_custom_call.1} parent=31 // pred_check_branch
          %214 = sbr.rel (%p212) target = $region44
        $region43: #{tpu_custom_call.1} parent=31 // pred_region
          %215 = dma.done [#allocation7], 16
        $region44: #{tpu_custom_call.1} parent=31 // pred_fallthru
          _
        %p216 = pneg %p52
        %p217 = pneg %p49
        %s218 = sand.u32 %s19, 1
        %s219 = scalar_lea.sflag [#allocation7], %s218
        %s220 = sand.u32 %s65, 1
        %s221 = smul.addr %s220, 512
        %s222 = scalar_lea.vmem [#allocation6], %s221
        %p223 = pneg %p78
        %p224 = pneg %p75
        %p225 = pneg %p99
        %p226 = pneg %p96
        %p227 = pneg %p125
        %p228 = pneg %p122
        %p230 = scmp.eq.s32.totalorder %s24, 0
        // Predicated region
        $region45: #{tpu_custom_call.1} parent=31 // pred_check
          %p231 = pneg %p230
        $region46: #{tpu_custom_call.1} parent=31 // pred_check_branch
          %233 = sbr.rel (%p231) target = $region48
        $region47: #{tpu_custom_call.1} parent=31 // pred_region
          %234 = vst [vmem:[#allocation2] sm:$0xff] 0.0
        $region48: #{tpu_custom_call.1} parent=31 // pred_fallthru
          _
        %s235 = sadd.s32 %s24, 1
        %s236 = smul.u32 %s235, 8
        %s237 = smul.addr %s236, 8
        %s238 = scalar_lea.vmem [#allocation3], %s237
        %v239 = vld [vmem:[%s238] sm:$0xff]
        %v240 = vld [vmem:[%s238 + $0x8] sm:$0xff]
        %v241 = vld [vmem:[%s238 + $0x10] sm:$0xff]
        %v242 = vld [vmem:[%s238 + $0x18] sm:$0xff]
        %v243 = vld [vmem:[%s238 + $0x20] sm:$0xff]
        %v244 = vld [vmem:[%s238 + $0x28] sm:$0xff]
        %v245 = vld [vmem:[%s238 + $0x30] sm:$0xff]
        %v246 = vld [vmem:[%s238 + $0x38] sm:$0xff]
        %s247 = smul.u32 %s24, 8
        %s248 = smul.addr %s247, 8
        %s249 = scalar_lea.vmem [#allocation3], %s248
        %v250 = vld [vmem:[%s249] sm:$0xff]
        %v251 = vld [vmem:[%s249 + $0x8] sm:$0xff]
        %v252 = vld [vmem:[%s249 + $0x10] sm:$0xff]
        %v253 = vld [vmem:[%s249 + $0x18] sm:$0xff]
        %v254 = vld [vmem:[%s249 + $0x20] sm:$0xff]
        %v255 = vld [vmem:[%s249 + $0x28] sm:$0xff]
        %v256 = vld [vmem:[%s249 + $0x30] sm:$0xff]
        %v257 = vld [vmem:[%s249 + $0x38] sm:$0xff]
        %v258 = vsub.f32 %v239, %v250
        %v259 = vsub.f32 %v240, %v251
        %v260 = vsub.f32 %v241, %v252
        %v261 = vsub.f32 %v242, %v253
        %v262 = vsub.f32 %v243, %v254
        %v263 = vsub.f32 %v244, %v255
        %v264 = vsub.f32 %v245, %v256
        %v265 = vsub.f32 %v246, %v257
        %v266 = vpack.c.bf16 %v258, %v258
        %v267 = vpack.c.bf16 %v259, %v259
        %v268 = vpack.c.bf16 %v260, %v260
        %v269 = vpack.c.bf16 %v261, %v261
        %v270 = vpack.c.bf16 %v262, %v262
        %v271 = vpack.c.bf16 %v263, %v263
        %v272 = vpack.c.bf16 %v264, %v264
        %v273 = vpack.c.bf16 %v265, %v265
        %v274 = vld [vmem:[#allocation2] sm:$0xff]
        %v275 = vld [vmem:[%s207] sm:$0xf]
        %v276 = vld [vmem:[%s207 + $0x4] sm:$0xf]
        %v277 = vld [vmem:[%s207 + $0x8] sm:$0xf]
        %v278 = vld [vmem:[%s207 + $0xc] sm:$0xf]
        %v279 = vld [vmem:[%s207 + $0x10] sm:$0xf]
        %v280 = vld [vmem:[%s207 + $0x14] sm:$0xf]
        %v281 = vld [vmem:[%s207 + $0x18] sm:$0xf]
        %v282 = vld [vmem:[%s207 + $0x1c] sm:$0xf]
        %v283 = vld [vmem:[%s207 + $0x20] sm:$0xf]
        %v284 = vld [vmem:[%s207 + $0x24] sm:$0xf]
        %v285 = vld [vmem:[%s207 + $0x28] sm:$0xf]
        %v286 = vld [vmem:[%s207 + $0x2c] sm:$0xf]
        %v287 = vld [vmem:[%s207 + $0x30] sm:$0xf]
        %v288 = vld [vmem:[%s207 + $0x34] sm:$0xf]
        %v289 = vld [vmem:[%s207 + $0x38] sm:$0xf]
        %v290 = vld [vmem:[%s207 + $0x3c] sm:$0xf]
        %v291 = vld [vmem:[%s207 + $0x40] sm:$0xf]
        %v292 = vld [vmem:[%s207 + $0x44] sm:$0xf]
        %v293 = vld [vmem:[%s207 + $0x48] sm:$0xf]
        %v294 = vld [vmem:[%s207 + $0x4c] sm:$0xf]
        %v295 = vld [vmem:[%s207 + $0x50] sm:$0xf]
        %v296 = vld [vmem:[%s207 + $0x54] sm:$0xf]
        %v297 = vld [vmem:[%s207 + $0x58] sm:$0xf]
        %v298 = vld [vmem:[%s207 + $0x5c] sm:$0xf]
        %v299 = vld [vmem:[%s207 + $0x60] sm:$0xf]
        %v300 = vld [vmem:[%s207 + $0x64] sm:$0xf]
        %v301 = vld [vmem:[%s207 + $0x68] sm:$0xf]
        %v302 = vld [vmem:[%s207 + $0x6c] sm:$0xf]
        %v303 = vld [vmem:[%s207 + $0x70] sm:$0xf]
        %v304 = vld [vmem:[%s207 + $0x74] sm:$0xf]
        %v305 = vld [vmem:[%s207 + $0x78] sm:$0xf]
        %v306 = vld [vmem:[%s207 + $0x7c] sm:$0xf]
        %v307 = vld [vmem:[%s207 + $0x80] sm:$0xf]
        %v308 = vld [vmem:[%s207 + $0x84] sm:$0xf]
        %v309 = vld [vmem:[%s207 + $0x88] sm:$0xf]
        %v310 = vld [vmem:[%s207 + $0x8c] sm:$0xf]
        %v311 = vld [vmem:[%s207 + $0x90] sm:$0xf]
        %v312 = vld [vmem:[%s207 + $0x94] sm:$0xf]
        %v313 = vld [vmem:[%s207 + $0x98] sm:$0xf]
        %v314 = vld [vmem:[%s207 + $0x9c] sm:$0xf]
        %v315 = vld [vmem:[%s207 + $0xa0] sm:$0xf]
        %v316 = vld [vmem:[%s207 + $0xa4] sm:$0xf]
        %v317 = vld [vmem:[%s207 + $0xa8] sm:$0xf]
        %v318 = vld [vmem:[%s207 + $0xac] sm:$0xf]
        %v319 = vld [vmem:[%s207 + $0xb0] sm:$0xf]
        %v320 = vld [vmem:[%s207 + $0xb4] sm:$0xf]
        %v321 = vld [vmem:[%s207 + $0xb8] sm:$0xf]
        %v322 = vld [vmem:[%s207 + $0xbc] sm:$0xf]
        %v323 = vld [vmem:[%s207 + $0xc0] sm:$0xf]
        %v324 = vld [vmem:[%s207 + $0xc4] sm:$0xf]
        %v325 = vld [vmem:[%s207 + $0xc8] sm:$0xf]
        %v326 = vld [vmem:[%s207 + $0xcc] sm:$0xf]
        %v327 = vld [vmem:[%s207 + $0xd0] sm:$0xf]
        %v328 = vld [vmem:[%s207 + $0xd4] sm:$0xf]
        %v329 = vld [vmem:[%s207 + $0xd8] sm:$0xf]
        %v330 = vld [vmem:[%s207 + $0xdc] sm:$0xf]
        %v331 = vld [vmem:[%s207 + $0xe0] sm:$0xf]
        %v332 = vld [vmem:[%s207 + $0xe4] sm:$0xf]
        %v333 = vld [vmem:[%s207 + $0xe8] sm:$0xf]
        %v334 = vld [vmem:[%s207 + $0xec] sm:$0xf]
        %v335 = vld [vmem:[%s207 + $0xf0] sm:$0xf]
        %v336 = vld [vmem:[%s207 + $0xf4] sm:$0xf]
        %v337 = vld [vmem:[%s207 + $0xf8] sm:$0xf]
        %v338 = vld [vmem:[%s207 + $0xfc] sm:$0xf]
        %v339 = vld [vmem:[%s207 + $0x100] sm:$0xf]
        %v340 = vld [vmem:[%s207 + $0x104] sm:$0xf]
        %v341 = vld [vmem:[%s207 + $0x108] sm:$0xf]
        %v342 = vld [vmem:[%s207 + $0x10c] sm:$0xf]
        %v343 = vld [vmem:[%s207 + $0x110] sm:$0xf]
        %v344 = vld [vmem:[%s207 + $0x114] sm:$0xf]
        %v345 = vld [vmem:[%s207 + $0x118] sm:$0xf]
        %v346 = vld [vmem:[%s207 + $0x11c] sm:$0xf]
        %v347 = vld [vmem:[%s207 + $0x120] sm:$0xf]
        %v348 = vld [vmem:[%s207 + $0x124] sm:$0xf]
        %v349 = vld [vmem:[%s207 + $0x128] sm:$0xf]
        %v350 = vld [vmem:[%s207 + $0x12c] sm:$0xf]
        %v351 = vld [vmem:[%s207 + $0x130] sm:$0xf]
        %v352 = vld [vmem:[%s207 + $0x134] sm:$0xf]
        %v353 = vld [vmem:[%s207 + $0x138] sm:$0xf]
        %v354 = vld [vmem:[%s207 + $0x13c] sm:$0xf]
        %v355 = vld [vmem:[%s207 + $0x140] sm:$0xf]
        %v356 = vld [vmem:[%s207 + $0x144] sm:$0xf]
        %v357 = vld [vmem:[%s207 + $0x148] sm:$0xf]
        %v358 = vld [vmem:[%s207 + $0x14c] sm:$0xf]
        %v359 = vld [vmem:[%s207 + $0x150] sm:$0xf]
        %v360 = vld [vmem:[%s207 + $0x154] sm:$0xf]
        %v361 = vld [vmem:[%s207 + $0x158] sm:$0xf]
        %v362 = vld [vmem:[%s207 + $0x15c] sm:$0xf]
        %v363 = vld [vmem:[%s207 + $0x160] sm:$0xf]
        %v364 = vld [vmem:[%s207 + $0x164] sm:$0xf]
        %v365 = vld [vmem:[%s207 + $0x168] sm:$0xf]
        %v366 = vld [vmem:[%s207 + $0x16c] sm:$0xf]
        %v367 = vld [vmem:[%s207 + $0x170] sm:$0xf]
        %v368 = vld [vmem:[%s207 + $0x174] sm:$0xf]
        %v369 = vld [vmem:[%s207 + $0x178] sm:$0xf]
        %v370 = vld [vmem:[%s207 + $0x17c] sm:$0xf]
        %v371 = vld [vmem:[%s207 + $0x180] sm:$0xf]
        %v372 = vld [vmem:[%s207 + $0x184] sm:$0xf]
        %v373 = vld [vmem:[%s207 + $0x188] sm:$0xf]
        %v374 = vld [vmem:[%s207 + $0x18c] sm:$0xf]
        %v375 = vld [vmem:[%s207 + $0x190] sm:$0xf]
        %v376 = vld [vmem:[%s207 + $0x194] sm:$0xf]
        %v377 = vld [vmem:[%s207 + $0x198] sm:$0xf]
        %v378 = vld [vmem:[%s207 + $0x19c] sm:$0xf]
        %v379 = vld [vmem:[%s207 + $0x1a0] sm:$0xf]
        %v380 = vld [vmem:[%s207 + $0x1a4] sm:$0xf]
        %v381 = vld [vmem:[%s207 + $0x1a8] sm:$0xf]
        %v382 = vld [vmem:[%s207 + $0x1ac] sm:$0xf]
        %v383 = vld [vmem:[%s207 + $0x1b0] sm:$0xf]
        %v384 = vld [vmem:[%s207 + $0x1b4] sm:$0xf]
        %v385 = vld [vmem:[%s207 + $0x1b8] sm:$0xf]
        %v386 = vld [vmem:[%s207 + $0x1bc] sm:$0xf]
        %v387 = vld [vmem:[%s207 + $0x1c0] sm:$0xf]
        %v388 = vld [vmem:[%s207 + $0x1c4] sm:$0xf]
        %v389 = vld [vmem:[%s207 + $0x1c8] sm:$0xf]
        %v390 = vld [vmem:[%s207 + $0x1cc] sm:$0xf]
        %v391 = vld [vmem:[%s207 + $0x1d0] sm:$0xf]
        %v392 = vld [vmem:[%s207 + $0x1d4] sm:$0xf]
        %v393 = vld [vmem:[%s207 + $0x1d8] sm:$0xf]
        %v394 = vld [vmem:[%s207 + $0x1dc] sm:$0xf]
        %v395 = vld [vmem:[%s207 + $0x1e0] sm:$0xf]
        %v396 = vld [vmem:[%s207 + $0x1e4] sm:$0xf]
        %v397 = vld [vmem:[%s207 + $0x1e8] sm:$0xf]
        %v398 = vld [vmem:[%s207 + $0x1ec] sm:$0xf]
        %v399 = vld [vmem:[%s207 + $0x1f0] sm:$0xf]
        %v400 = vld [vmem:[%s207 + $0x1f4] sm:$0xf]
        %v401 = vld [vmem:[%s207 + $0x1f8] sm:$0xf]
        %v402 = vld [vmem:[%s207 + $0x1fc] sm:$0xf]
        %v531 = vunpack.c.l.b16 %v275
        %v532 = vunpack.c.l.b16 %v276
        %v533 = vunpack.c.l.b16 %v277
        %v534 = vunpack.c.l.b16 %v278
        %v535 = vunpack.c.l.b16 %v279
        %v536 = vunpack.c.l.b16 %v280
        %v537 = vunpack.c.l.b16 %v281
        %v538 = vunpack.c.l.b16 %v282
        %v539 = vunpack.c.l.b16 %v283
        %v540 = vunpack.c.l.b16 %v284
        %v541 = vunpack.c.l.b16 %v285
        %v542 = vunpack.c.l.b16 %v286
        %v543 = vunpack.c.l.b16 %v287
        %v544 = vunpack.c.l.b16 %v288
        %v545 = vunpack.c.l.b16 %v289
        %v546 = vunpack.c.l.b16 %v290
        %v547 = vunpack.c.l.b16 %v291
        %v548 = vunpack.c.l.b16 %v292
        %v549 = vunpack.c.l.b16 %v293
        %v550 = vunpack.c.l.b16 %v294
        %v551 = vunpack.c.l.b16 %v295
        %v552 = vunpack.c.l.b16 %v296
        %v553 = vunpack.c.l.b16 %v297
        %v554 = vunpack.c.l.b16 %v298
        %v555 = vunpack.c.l.b16 %v299
        %v556 = vunpack.c.l.b16 %v300
        %v557 = vunpack.c.l.b16 %v301
        %v558 = vunpack.c.l.b16 %v302
        %v559 = vunpack.c.l.b16 %v303
        %v560 = vunpack.c.l.b16 %v304
        %v561 = vunpack.c.l.b16 %v305
        %v562 = vunpack.c.l.b16 %v306
        %v563 = vunpack.c.l.b16 %v307
        %v564 = vunpack.c.l.b16 %v308
        %v565 = vunpack.c.l.b16 %v309
        %v566 = vunpack.c.l.b16 %v310
        %v567 = vunpack.c.l.b16 %v311
        %v568 = vunpack.c.l.b16 %v312
        %v569 = vunpack.c.l.b16 %v313
        %v570 = vunpack.c.l.b16 %v314
        %v571 = vunpack.c.l.b16 %v315
        %v572 = vunpack.c.l.b16 %v316
        %v573 = vunpack.c.l.b16 %v317
        %v574 = vunpack.c.l.b16 %v318
        %v575 = vunpack.c.l.b16 %v319
        %v576 = vunpack.c.l.b16 %v320
        %v577 = vunpack.c.l.b16 %v321
        %v578 = vunpack.c.l.b16 %v322
        %v579 = vunpack.c.l.b16 %v323
        %v580 = vunpack.c.l.b16 %v324
        %v581 = vunpack.c.l.b16 %v325
        %v582 = vunpack.c.l.b16 %v326
        %v583 = vunpack.c.l.b16 %v327
        %v584 = vunpack.c.l.b16 %v328
        %v585 = vunpack.c.l.b16 %v329
        %v586 = vunpack.c.l.b16 %v330
        %v587 = vunpack.c.l.b16 %v331
        %v588 = vunpack.c.l.b16 %v332
        %v589 = vunpack.c.l.b16 %v333
        %v590 = vunpack.c.l.b16 %v334
        %v591 = vunpack.c.l.b16 %v335
        %v592 = vunpack.c.l.b16 %v336
        %v593 = vunpack.c.l.b16 %v337
        %v594 = vunpack.c.l.b16 %v338
        %v595 = vunpack.c.l.b16 %v339
        %v596 = vunpack.c.l.b16 %v340
        %v597 = vunpack.c.l.b16 %v341
        %v598 = vunpack.c.l.b16 %v342
        %v599 = vunpack.c.l.b16 %v343
        %v600 = vunpack.c.l.b16 %v344
        %v601 = vunpack.c.l.b16 %v345
        %v602 = vunpack.c.l.b16 %v346
        %v603 = vunpack.c.l.b16 %v347
        %v604 = vunpack.c.l.b16 %v348
        %v605 = vunpack.c.l.b16 %v349
        %v606 = vunpack.c.l.b16 %v350
        %v607 = vunpack.c.l.b16 %v351
        %v608 = vunpack.c.l.b16 %v352
        %v609 = vunpack.c.l.b16 %v353
        %v610 = vunpack.c.l.b16 %v354
        %v611 = vunpack.c.l.b16 %v355
        %v612 = vunpack.c.l.b16 %v356
        %v613 = vunpack.c.l.b16 %v357
        %v614 = vunpack.c.l.b16 %v358
        %v615 = vunpack.c.l.b16 %v359
        %v616 = vunpack.c.l.b16 %v360
        %v617 = vunpack.c.l.b16 %v361
        %v618 = vunpack.c.l.b16 %v362
        %v619 = vunpack.c.l.b16 %v363
        %v620 = vunpack.c.l.b16 %v364
        %v621 = vunpack.c.l.b16 %v365
        %v622 = vunpack.c.l.b16 %v366
        %v623 = vunpack.c.l.b16 %v367
        %v624 = vunpack.c.l.b16 %v368
        %v625 = vunpack.c.l.b16 %v369
        %v626 = vunpack.c.l.b16 %v370
        %v627 = vunpack.c.l.b16 %v371
        %v628 = vunpack.c.l.b16 %v372
        %v629 = vunpack.c.l.b16 %v373
        %v630 = vunpack.c.l.b16 %v374
        %v631 = vunpack.c.l.b16 %v375
        %v632 = vunpack.c.l.b16 %v376
        %v633 = vunpack.c.l.b16 %v377
        %v634 = vunpack.c.l.b16 %v378
        %v635 = vunpack.c.l.b16 %v379
        %v636 = vunpack.c.l.b16 %v380
        %v637 = vunpack.c.l.b16 %v381
        %v638 = vunpack.c.l.b16 %v382
        %v639 = vunpack.c.l.b16 %v383
        %v640 = vunpack.c.l.b16 %v384
        %v641 = vunpack.c.l.b16 %v385
        %v642 = vunpack.c.l.b16 %v386
        %v643 = vunpack.c.l.b16 %v387
        %v644 = vunpack.c.l.b16 %v388
        %v645 = vunpack.c.l.b16 %v389
        %v646 = vunpack.c.l.b16 %v390
        %v647 = vunpack.c.l.b16 %v391
        %v648 = vunpack.c.l.b16 %v392
        %v649 = vunpack.c.l.b16 %v393
        %v650 = vunpack.c.l.b16 %v394
        %v651 = vunpack.c.l.b16 %v395
        %v652 = vunpack.c.l.b16 %v396
        %v653 = vunpack.c.l.b16 %v397
        %v654 = vunpack.c.l.b16 %v398
        %v655 = vunpack.c.l.b16 %v399
        %v656 = vunpack.c.l.b16 %v400
        %v657 = vunpack.c.l.b16 %v401
        %v658 = vunpack.c.l.b16 %v402
        %v659 = vpack.c.b16 %v532, %v531
        %v660 = vpack.c.b16 %v534, %v533
        %v661 = vpack.c.b16 %v536, %v535
        %v662 = vpack.c.b16 %v538, %v537
        %v663 = vpack.c.b16 %v540, %v539
        %v664 = vpack.c.b16 %v542, %v541
        %v665 = vpack.c.b16 %v544, %v543
        %v666 = vpack.c.b16 %v546, %v545
        %v667 = vpack.c.b16 %v548, %v547
        %v668 = vpack.c.b16 %v550, %v549
        %v669 = vpack.c.b16 %v552, %v551
        %v670 = vpack.c.b16 %v554, %v553
        %v671 = vpack.c.b16 %v556, %v555
        %v672 = vpack.c.b16 %v558, %v557
        %v673 = vpack.c.b16 %v560, %v559
        %v674 = vpack.c.b16 %v562, %v561
        %v675 = vpack.c.b16 %v564, %v563
        %v676 = vpack.c.b16 %v566, %v565
        %v677 = vpack.c.b16 %v568, %v567
        %v678 = vpack.c.b16 %v570, %v569
        %v679 = vpack.c.b16 %v572, %v571
        %v680 = vpack.c.b16 %v574, %v573
        %v681 = vpack.c.b16 %v576, %v575
        %v682 = vpack.c.b16 %v578, %v577
        %v683 = vpack.c.b16 %v580, %v579
        %v684 = vpack.c.b16 %v582, %v581
        %v685 = vpack.c.b16 %v584, %v583
        %v686 = vpack.c.b16 %v586, %v585
        %v687 = vpack.c.b16 %v588, %v587
        %v688 = vpack.c.b16 %v590, %v589
        %v689 = vpack.c.b16 %v592, %v591
        %v690 = vpack.c.b16 %v594, %v593
        %v691 = vpack.c.b16 %v596, %v595
        %v692 = vpack.c.b16 %v598, %v597
        %v693 = vpack.c.b16 %v600, %v599
        %v694 = vpack.c.b16 %v602, %v601
        %v695 = vpack.c.b16 %v604, %v603
        %v696 = vpack.c.b16 %v606, %v605
        %v697 = vpack.c.b16 %v608, %v607
        %v698 = vpack.c.b16 %v610, %v609
        %v699 = vpack.c.b16 %v612, %v611
        %v700 = vpack.c.b16 %v614, %v613
        %v701 = vpack.c.b16 %v616, %v615
        %v702 = vpack.c.b16 %v618, %v617
        %v703 = vpack.c.b16 %v620, %v619
        %v704 = vpack.c.b16 %v622, %v621
        %v705 = vpack.c.b16 %v624, %v623
        %v706 = vpack.c.b16 %v626, %v625
        %v707 = vpack.c.b16 %v628, %v627
        %v708 = vpack.c.b16 %v630, %v629
        %v709 = vpack.c.b16 %v632, %v631
        %v710 = vpack.c.b16 %v634, %v633
        %v711 = vpack.c.b16 %v636, %v635
        %v712 = vpack.c.b16 %v638, %v637
        %v713 = vpack.c.b16 %v640, %v639
        %v714 = vpack.c.b16 %v642, %v641
        %v715 = vpack.c.b16 %v644, %v643
        %v716 = vpack.c.b16 %v646, %v645
        %v717 = vpack.c.b16 %v648, %v647
        %v718 = vpack.c.b16 %v650, %v649
        %v719 = vpack.c.b16 %v652, %v651
        %v720 = vpack.c.b16 %v654, %v653
        %v721 = vpack.c.b16 %v656, %v655
        %v722 = vpack.c.b16 %v658, %v657
        %787 = vmatprep.subr.bf16.mxu0 0
        %788 = vmatpush1.bf16.msra.mxu0 %v659
        %789 = vmatprep.subr.bf16.mxu0 0
        %790 = vmatpush1.bf16.msra.mxu0 %v660
        %791 = vmatprep.subr.bf16.mxu0 0
        %792 = vmatpush1.bf16.msra.mxu0 %v661
        %793 = vmatprep.subr.bf16.mxu0 0
        %794 = vmatpush1.bf16.msra.mxu0 %v662
        %795 = vmatprep.subr.bf16.mxu0 0
        %796 = vmatpush1.bf16.msra.mxu0 %v663
        %797 = vmatprep.subr.bf16.mxu0 0
        %798 = vmatpush1.bf16.msra.mxu0 %v664
        %799 = vmatprep.subr.bf16.mxu0 0
        %800 = vmatpush1.bf16.msra.mxu0 %v665
        %801 = vmatprep.subr.bf16.mxu0 0
        %802 = vmatpush1.bf16.msra.mxu0 %v666
        %803 = vmatprep.subr.bf16.mxu0 0
        %804 = vmatpush1.bf16.msra.mxu0 %v667
        %805 = vmatprep.subr.bf16.mxu0 0
        %806 = vmatpush1.bf16.msra.mxu0 %v668
        %807 = vmatprep.subr.bf16.mxu0 0
        %808 = vmatpush1.bf16.msra.mxu0 %v669
        %809 = vmatprep.subr.bf16.mxu0 0
        %810 = vmatpush1.bf16.msra.mxu0 %v670
        %811 = vmatprep.subr.bf16.mxu0 0
        %812 = vmatpush1.bf16.msra.mxu0 %v671
        %813 = vmatprep.subr.bf16.mxu0 0
        %814 = vmatpush1.bf16.msra.mxu0 %v672
        %815 = vmatprep.subr.bf16.mxu0 0
        %816 = vmatpush1.bf16.msra.mxu0 %v673
        %817 = vmatprep.subr.bf16.mxu0 0
        %818 = vmatpush1.bf16.msra.mxu0 %v674
        %819 = vmatprep.mubr.bf16.mxu0 %v267
        %820 = vmatmul.mubr.bf16.gmra.mrb[0].mxu0 %v266
        %v821 = vpop.f32.mrb[0].mxu0
        %v822 = vadd.f32 0.0, %v821
        %v823 = vpop.f32.mrb[0].mxu0
        %v824 = vpop.f32.mrb[0].mxu0
        %v825 = vpop.f32.mrb[0].mxu0
        %826 = vdwg.mxu0
        %827 = vmatprep.subr.bf16.mxu0 0
        %828 = vmatpush1.bf16.msra.mxu0 %v675
        %829 = vmatprep.subr.bf16.mxu0 0
        %830 = vmatpush1.bf16.msra.mxu0 %v676
        %831 = vmatprep.subr.bf16.mxu0 0
        %832 = vmatpush1.bf16.msra.mxu0 %v677
        %833 = vmatprep.subr.bf16.mxu0 0
        %834 = vmatpush1.bf16.msra.mxu0 %v678
        %835 = vmatprep.subr.bf16.mxu0 0
        %836 = vmatpush1.bf16.msra.mxu0 %v679
        %837 = vmatprep.subr.bf16.mxu0 0
        %838 = vmatpush1.bf16.msra.mxu0 %v680
        %839 = vmatprep.subr.bf16.mxu0 0
        %840 = vmatpush1.bf16.msra.mxu0 %v681
        %841 = vmatprep.subr.bf16.mxu0 0
        %842 = vmatpush1.bf16.msra.mxu0 %v682
        %843 = vmatprep.subr.bf16.mxu0 0
        %844 = vmatpush1.bf16.msra.mxu0 %v683
        %845 = vmatprep.subr.bf16.mxu0 0
        %846 = vmatpush1.bf16.msra.mxu0 %v684
        %847 = vmatprep.subr.bf16.mxu0 0
        %848 = vmatpush1.bf16.msra.mxu0 %v685
        %849 = vmatprep.subr.bf16.mxu0 0
        %850 = vmatpush1.bf16.msra.mxu0 %v686
        %851 = vmatprep.subr.bf16.mxu0 0
        %852 = vmatpush1.bf16.msra.mxu0 %v687
        %853 = vmatprep.subr.bf16.mxu0 0
        %854 = vmatpush1.bf16.msra.mxu0 %v688
        %855 = vmatprep.subr.bf16.mxu0 0
        %856 = vmatpush1.bf16.msra.mxu0 %v689
        %857 = vmatprep.subr.bf16.mxu0 0
        %858 = vmatpush1.bf16.msra.mxu0 %v690
        %859 = vmatprep.mubr.bf16.mxu0 %v269
        %860 = vmatmul.mubr.bf16.gmra.mrb[0].mxu0 %v268
        %v861 = vpop.f32.mrb[0].mxu0
        %v862 = vadd.f32 %v822, %v861
        %v863 = vpop.f32.mrb[0].mxu0
        %v864 = vpop.f32.mrb[0].mxu0
        %v865 = vpop.f32.mrb[0].mxu0
        %866 = vdwg.mxu0
        %867 = vmatprep.subr.bf16.mxu0 0
        %868 = vmatpush1.bf16.msra.mxu0 %v691
        %869 = vmatprep.subr.bf16.mxu0 0
        %870 = vmatpush1.bf16.msra.mxu0 %v692
        %871 = vmatprep.subr.bf16.mxu0 0
        %872 = vmatpush1.bf16.msra.mxu0 %v693
        %873 = vmatprep.subr.bf16.mxu0 0
        %874 = vmatpush1.bf16.msra.mxu0 %v694
        %875 = vmatprep.subr.bf16.mxu0 0
        %876 = vmatpush1.bf16.msra.mxu0 %v695
        %877 = vmatprep.subr.bf16.mxu0 0
        %878 = vmatpush1.bf16.msra.mxu0 %v696
        %879 = vmatprep.subr.bf16.mxu0 0
        %880 = vmatpush1.bf16.msra.mxu0 %v697
        %881 = vmatprep.subr.bf16.mxu0 0
        %882 = vmatpush1.bf16.msra.mxu0 %v698
        %883 = vmatprep.subr.bf16.mxu0 0
        %884 = vmatpush1.bf16.msra.mxu0 %v699
        %885 = vmatprep.subr.bf16.mxu0 0
        %886 = vmatpush1.bf16.msra.mxu0 %v700
        %887 = vmatprep.subr.bf16.mxu0 0
        %888 = vmatpush1.bf16.msra.mxu0 %v701
        %889 = vmatprep.subr.bf16.mxu0 0
        %890 = vmatpush1.bf16.msra.mxu0 %v702
        %891 = vmatprep.subr.bf16.mxu0 0
        %892 = vmatpush1.bf16.msra.mxu0 %v703
        %893 = vmatprep.subr.bf16.mxu0 0
        %894 = vmatpush1.bf16.msra.mxu0 %v704
        %895 = vmatprep.subr.bf16.mxu0 0
        %896 = vmatpush1.bf16.msra.mxu0 %v705
        %897 = vmatprep.subr.bf16.mxu0 0
        %898 = vmatpush1.bf16.msra.mxu0 %v706
        %899 = vmatprep.mubr.bf16.mxu0 %v271
        %900 = vmatmul.mubr.bf16.gmra.mrb[0].mxu0 %v270
        %v901 = vpop.f32.mrb[0].mxu0
        %v902 = vadd.f32 %v862, %v901
        %v903 = vpop.f32.mrb[0].mxu0
        %v904 = vpop.f32.mrb[0].mxu0
        %v905 = vpop.f32.mrb[0].mxu0
        %906 = vdwg.mxu0
        %907 = vmatprep.subr.bf16.mxu0 0
        %908 = vmatpush1.bf16.msra.mxu0 %v707
        %909 = vmatprep.subr.bf16.mxu0 0
        %910 = vmatpush1.bf16.msra.mxu0 %v708
        %911 = vmatprep.subr.bf16.mxu0 0
        %912 = vmatpush1.bf16.msra.mxu0 %v709
        %913 = vmatprep.subr.bf16.mxu0 0
        %914 = vmatpush1.bf16.msra.mxu0 %v710
        %915 = vmatprep.subr.bf16.mxu0 0
        %916 = vmatpush1.bf16.msra.mxu0 %v711
        %917 = vmatprep.subr.bf16.mxu0 0
        %918 = vmatpush1.bf16.msra.mxu0 %v712
        %919 = vmatprep.subr.bf16.mxu0 0
        %920 = vmatpush1.bf16.msra.mxu0 %v713
        %921 = vmatprep.subr.bf16.mxu0 0
        %922 = vmatpush1.bf16.msra.mxu0 %v714
        %923 = vmatprep.subr.bf16.mxu0 0
        %924 = vmatpush1.bf16.msra.mxu0 %v715
        %925 = vmatprep.subr.bf16.mxu0 0
        %926 = vmatpush1.bf16.msra.mxu0 %v716
        %927 = vmatprep.subr.bf16.mxu0 0
        %928 = vmatpush1.bf16.msra.mxu0 %v717
        %929 = vmatprep.subr.bf16.mxu0 0
        %930 = vmatpush1.bf16.msra.mxu0 %v718
        %931 = vmatprep.subr.bf16.mxu0 0
        %932 = vmatpush1.bf16.msra.mxu0 %v719
        %933 = vmatprep.subr.bf16.mxu0 0
        %934 = vmatpush1.bf16.msra.mxu0 %v720
        %935 = vmatprep.subr.bf16.mxu0 0
        %936 = vmatpush1.bf16.msra.mxu0 %v721
        %937 = vmatprep.subr.bf16.mxu0 0
        %938 = vmatpush1.bf16.msra.mxu0 %v722
        %939 = vmatprep.mubr.bf16.mxu0 %v273
        %940 = vmatmul.mubr.bf16.gmra.mrb[0].mxu0 %v272
        %v941 = vpop.f32.mrb[0].mxu0
        %v942 = vadd.f32 %v902, %v941
        %v943 = vpop.f32.mrb[0].mxu0
        %v944 = vpop.f32.mrb[0].mxu0
        %v945 = vpop.f32.mrb[0].mxu0
        %946 = vdwg.mxu0
        %v947 = vadd.f32 %v274, %v942
        %948 = vst [vmem:[#allocation2] sm:$0xff] %v947
        %p949 = scmp.eq.s32.totalorder %s24, 6
        // Predicated region
        $region49: #{tpu_custom_call.1} parent=31 // pred_check
          %p950 = pneg %p949
        $region50: #{tpu_custom_call.1} parent=31 // pred_check_branch
          %952 = sbr.rel (%p950) target = $region52
        $region51: #{tpu_custom_call.1} parent=31 // pred_region
          %v953 = vld [vmem:[#allocation2] sm:$0xff]
          %v954 = vld [vmem:[#allocation8] sm:$0x1]
          %v956 = vlaneseq
          %v957 = vshrl.u32 %v956, 7
          %v958 = vsub.s32 0, %v957
          %v959 = vrot.slane %v954, %v958
          %v961 = vadd.f32 %v953, %v959
          %962 = vst [vmem:[#allocation9] sm:$0xff] %v961
        $region52: #{tpu_custom_call.1} parent=31 // pred_fallthru
          _
        // Predicated region
        $region53: #{tpu_custom_call.1} parent=31 // pred_check
          %p963 = pneg %p122
        $region54: #{tpu_custom_call.1} parent=31 // pred_check_branch
          %965 = sbr.rel (%p963) target = $region56
        $region55: #{tpu_custom_call.1} parent=31 // pred_region
          %s967 = ssub.s32 128, 128
          %968 = vsyncadd [#allocation5], %s967
          %s969 = smul.addr %s23, 128
          %s970 = scalar_lea.hbm %s3, %s969
          %s972 = sshll.u32 [#allocation9], 4
          %s973 = int_to_ptr.vmem [resolvable:$true] %s972
          %975 = dma.vmem_to_hbm [thread:$0]  %s973, 128, %s970, [#allocation5]
        $region56: #{tpu_custom_call.1} parent=31 // pred_fallthru
          _
        // Predicated region
        $region57: #{tpu_custom_call.1} parent=31 // pred_check
          %p976 = pneg %p122
        $region58: #{tpu_custom_call.1} parent=31 // pred_check_branch
          %978 = sbr.rel (%p976) target = $region60
        $region59: #{tpu_custom_call.1} parent=31 // pred_region
          %979 = dma.done [#allocation5], 128
        $region60: #{tpu_custom_call.1} parent=31 // pred_fallthru
          _
      $region32: #{tpu_custom_call.1} parent=5 // pred_fallthru
        _
      %p980 = scmp.le.s32.totalorder 2, %s14
      // Predicated region
      $region61: #{tpu_custom_call.1} parent=5 // pred_check
        %p981 = pneg %p980
      $region62: #{tpu_custom_call.1} parent=5 // pred_check_branch
        %983 = sbr.rel (%p981) target = $region64
      $region63: #{tpu_custom_call.1} parent=5 // pred_region
        %s984 = ssub.s32 %s14, 2
      $region64: #{tpu_custom_call.1} parent=5 // pred_fallthru
        _
    $region6: #{tpu_custom_call.1} parent=1 // loop_footer
      %s18 = sadd.s32 1, %s14
    $region7: #{tpu_custom_call.1} parent=1 // loop_footer_branch
      %13 = sbr.rel target = $region3
    $region8: #{tpu_custom_call.1} parent=1 // loop_exit
      _
    %985 = vsyncpa [#allocation4], 1
    %s986 = scalar_lea.sflag [#allocation4], 1
    %987 = vsyncpa %s986, 1
    %988 = vsyncpa [#allocation7], 1
    %s989 = scalar_lea.sflag [#allocation7], 1
    %990 = vsyncpa %s989, 1
    %991 = vsyncpa [#allocation5], 1
    %s992 = scalar_lea.sflag [#allocation5], 1
    %993 = vsyncpa %s992, 1

</llo_original>
